<compile_context>
chip_gen: v5e
topology: v5e:2x2
jax: 0.10.0
libtpu: 0.0.40
codegen_flags: <defaults>
</compile_context>

<pallas_src>
import numpy as np
import jax
import jax.numpy as jnp
from jax.experimental import pallas as pl
from jax.experimental.pallas import tpu as pltpu


def _dk_embedding_kernel(s_ref, kt_ref, out_ref):
    """One (TN, TM) tile of the basis matrix phi."""
    s = s_ref[...]                    # (TN, 2)
    s1 = s[:, 0:1]                    # (TN, 1)
    s2 = s[:, 1:2]                    # (TN, 1)
    k1 = kt_ref[0:1, :]               # (1, TM) knot x
    k2 = kt_ref[1:2, :]               # (1, TM) knot y
    inv_t2 = kt_ref[2:3, :]           # (1, TM) 1/theta^2 (host-precomputed)

    dx = s1 - k1                      # (TN, TM) via broadcast
    dy = s2 - k2
    d2 = (dx * dx + dy * dy) * inv_t2  # squared scaled distance = d^2
    d = jnp.sqrt(d2)                   # EUP

    # Clamp replaces the support mask: outside support (d > 1) om6 == 0 and
    # poly is finite, so w is exactly 0 without a compare/select.
    one_minus = jnp.maximum(1.0 - d, 0.0)
    om2 = one_minus * one_minus
    om6 = om2 * om2 * om2
    poly = (35.0 / 3.0) * d2 + 6.0 * d + 1.0   # 1/3 folded into constants
    out_ref[...] = (om6 * poly).astype(out_ref.dtype)


def _build_knots_and_theta(K: int):
    """Concatenated knot grid (M, 2) and per-column 1/theta^2 (M,)."""
    num_basis = [(9 * 2 ** (h - 1) + 1) ** 2 for h in range(1, K + 1)]
    knots_list, inv_theta2_list = [], []
    for nb in num_basis:
        side = int(np.sqrt(nb))
        kn = np.linspace(0.0, 1.0, side, dtype=np.float32)
        k1, k2 = np.meshgrid(kn, kn, indexing="ij")
        knots_list.append(np.stack([k1.ravel(), k2.ravel()], axis=1))
        theta = 1.0 / np.sqrt(nb) * 2.5
        inv_theta2_list.append(np.full((nb,), 1.0 / (theta * theta), np.float32))
    knots = np.concatenate(knots_list, axis=0).astype(np.float32)            # (M, 2)
    inv_theta2 = np.concatenate(inv_theta2_list, axis=0).astype(np.float32)  # (M,)
    return knots, inv_theta2, sum(num_basis)


def deep_kriging_embedding_2d(s: jax.Array, K: int,
                              tile_n: int = 512, tile_m: int = 4096,
                              out_dtype=jnp.float32) -> jax.Array:
    """Pallas implementation of DeepKrigingEmbedding2D(K).forward(s).

    s: (N, 2) float32 coordinates. Returns phi: (N, sum(num_basis)) out_dtype.
    (out_dtype=jnp.bfloat16 roughly halves HBM write traffic on the
    write-bound path if the consumer tolerates it.)
    """
    assert s.ndim == 2 and s.shape[1] == 2
    N = s.shape[0]
    knots_np, inv_theta2_np, M = _build_knots_and_theta(K)

    out_bytes = jnp.dtype(out_dtype).itemsize
    # Keep bf16 stores sublane-packed (multiple of 16 rows), f32 multiple of 8.
    min_n = 16 if out_bytes == 2 else 8
    tile_n = max(min_n, (tile_n // min_n) * min_n)
    tile_m = max(128, (tile_m // 128) * 128)

    n_al = pl.cdiv(N, min_n) * min_n
    m_al = pl.cdiv(M, 128) * 128
    tile_n_eff = min(tile_n, n_al)
    tile_m_eff = min(tile_m, m_al)

    # v7x megacore: on non-tiny problems keep an even (balanced) number of
    # grid steps across the two TensorCores.
    n_tiles = pl.cdiv(N, tile_n_eff)
    m_tiles = pl.cdiv(M, tile_m_eff)
    if (n_tiles * m_tiles % 2 == 1 and n_tiles * m_tiles < 8
            and N * M >= (1 << 21) and tile_n_eff >= 2 * min_n):
        tile_n_eff = max(min_n, ((tile_n_eff // 2) // min_n) * min_n)
        n_tiles = pl.cdiv(N, tile_n_eff)

    grid = (n_tiles, m_tiles)

    # Pad only the (cheap) inputs to full grid coverage; output stays exactly
    # (N, M) so only edge tiles pay masked stores and there is no trim slice.
    n_in_pad = n_tiles * tile_n_eff
    m_in_pad = m_tiles * tile_m_eff
    s_padded = jnp.zeros((n_in_pad, 2), jnp.float32).at[:N].set(s.astype(jnp.float32))

    # Padded knot columns use a far-away sentinel (10.0) -> weight exactly 0
    # and finite values; those columns are never written anyway.
    kt_np = np.full((3, m_in_pad), 10.0, dtype=np.float32)
    kt_np[2, :] = 1.0
    kt_np[0, :M] = knots_np[:, 0]
    kt_np[1, :M] = knots_np[:, 1]
    kt_np[2, :M] = inv_theta2_np
    kt = jnp.asarray(kt_np)                                    # (3, m_in_pad)

    # VMEM limit from actual need: double-buffered output tile + input tiles
    # + compiler-scratch margin (fits v7x's 64 MiB VMEM, unlocks the big tile
    # on v5e's 16 MiB scoped default).
    vmem_need = (2 * tile_n_eff * tile_m_eff * out_bytes
                 + 2 * (tile_n_eff * 2 + 3 * tile_m_eff) * 4
                 + (8 << 20))
    vmem_limit = int(min(max(vmem_need, 16 << 20), 96 << 20))

    # TODO(synk): optional v7x experiment — offload the cross term of d^2 to
    # the idle MXU via a (TN,2)x(2,TM) matmul; skipped pending measurement.
    phi = pl.pallas_call(
        _dk_embedding_kernel,
        out_shape=jax.ShapeDtypeStruct((N, M), out_dtype),
        grid_spec=pltpu.PrefetchScalarGridSpec(
            num_scalar_prefetch=0,
            grid=grid,
            in_specs=[
                pl.BlockSpec((tile_n_eff, 2), lambda i, j: (i, 0)),     # coords
                pl.BlockSpec((3, tile_m_eff), lambda i, j: (0, j)),     # knots + 1/theta^2
            ],
            out_specs=pl.BlockSpec((tile_n_eff, tile_m_eff), lambda i, j: (i, j)),
        ),
        compiler_params=pltpu.CompilerParams(
            dimension_semantics=("parallel", "parallel"),
            vmem_limit_bytes=vmem_limit),
    )(s_padded, kt)

    return phi


def _reference(s, K):
    """Pure-JAX reference mirroring the PyTorch forward."""
    knots_np, inv_theta2_np, M = _build_knots_and_theta(K)
    knots = jnp.asarray(knots_np)
    inv_theta = jnp.sqrt(jnp.asarray(inv_theta2_np))
    diff = s[:, None, :] - knots[None, :, :]                   # (N, M, 2)
    d = jnp.sqrt(jnp.sum(diff * diff, axis=-1)) * inv_theta[None, :]
    w = (1.0 - d) ** 6 * (35.0 * d * d + 18.0 * d + 3.0) / 3.0
    return jnp.where((d >= 0.0) & (d <= 1.0), w, 0.0)


if __name__ == "__main__":
    K = 2                      # num_basis = [100, 361], sum = 461
    N = 64                     # number of 2D query locations
    key = jax.random.PRNGKey(0)
    s = jax.random.uniform(key, (N, 2), dtype=jnp.float32)     # coords in [0,1]^2

    phi = deep_kriging_embedding_2d(s, K)
    phi = jax.block_until_ready(phi)

    ref = _reference(s, K)
    assert phi.shape == ref.shape == (N, 461), phi.shape
    np.testing.assert_allclose(np.asarray(phi), np.asarray(ref), rtol=1e-5, atol=1e-5)

    print("KERNEL_OK")
</pallas_src>

<mosaic_0001>
module attributes {stable_mosaic.version = 11 : i64} {
  func.func @_dk_embedding_kernel(%arg0: i32, %arg1: i32, %arg2: memref<64x2xf32, #tpu.memory_space<vmem>>, %arg3: memref<3x512xf32, #tpu.memory_space<vmem>>, %arg4: memref<64x512xf32, #tpu.memory_space<vmem>>) attributes {dimension_semantics = [#tpu.dimension_semantics<parallel>, #tpu.dimension_semantics<parallel>], iteration_bounds = array<i64: 1, 1>, scalar_prefetch = 0 : i64, scratch_operands = 0 : i64, tpu.core_type = #tpu.core_type<tc>, window_params = [{transform_indices = @transform_0, window_bounds = array<i64: 64, 2>}, {transform_indices = @transform_1, window_bounds = array<i64: 3, 512>}, {transform_indices = @transform_2, window_bounds = array<i64: 64, 512>}]} {
    %c0 = arith.constant 0 : index
    %c0_0 = arith.constant 0 : index
    %0 = vector.load %arg2[%c0, %c0_0] : memref<64x2xf32, #tpu.memory_space<vmem>>, vector<64x2xf32>
    %1 = vector.extract_strided_slice %0 {offsets = [0, 0], sizes = [64, 1], strides = [1, 1]} : vector<64x2xf32> to vector<64x1xf32>
    %2 = vector.extract_strided_slice %0 {offsets = [0, 1], sizes = [64, 1], strides = [1, 1]} : vector<64x2xf32> to vector<64x1xf32>
    %c0_1 = arith.constant 0 : index
    %c0_2 = arith.constant 0 : index
    %3 = vector.load %arg3[%c0_1, %c0_2] : memref<3x512xf32, #tpu.memory_space<vmem>>, vector<1x512xf32>
    %c1 = arith.constant 1 : index
    %c0_3 = arith.constant 0 : index
    %4 = vector.load %arg3[%c1, %c0_3] : memref<3x512xf32, #tpu.memory_space<vmem>>, vector<1x512xf32>
    %c2 = arith.constant 2 : index
    %c0_4 = arith.constant 0 : index
    %5 = vector.load %arg3[%c2, %c0_4] : memref<3x512xf32, #tpu.memory_space<vmem>>, vector<1x512xf32>
    %6 = vector.broadcast %1 : vector<64x1xf32> to vector<64x512xf32>
    %7 = vector.broadcast %3 : vector<1x512xf32> to vector<64x512xf32>
    %8 = arith.subf %6, %7 : vector<64x512xf32>
    %9 = vector.broadcast %2 : vector<64x1xf32> to vector<64x512xf32>
    %10 = vector.broadcast %4 : vector<1x512xf32> to vector<64x512xf32>
    %11 = arith.subf %9, %10 : vector<64x512xf32>
    %12 = arith.mulf %8, %8 : vector<64x512xf32>
    %13 = arith.mulf %11, %11 : vector<64x512xf32>
    %14 = arith.addf %12, %13 : vector<64x512xf32>
    %15 = vector.broadcast %5 : vector<1x512xf32> to vector<64x512xf32>
    %16 = arith.mulf %14, %15 : vector<64x512xf32>
    %17 = math.sqrt %16 : vector<64x512xf32>
    %cst = arith.constant 1.000000e+00 : f32
    %18 = vector.broadcast %cst : f32 to vector<64x512xf32>
    %19 = arith.subf %18, %17 : vector<64x512xf32>
    %cst_5 = arith.constant 0.000000e+00 : f32
    %20 = vector.broadcast %cst_5 : f32 to vector<64x512xf32>
    %21 = arith.maximumf %19, %20 : vector<64x512xf32>
    %22 = arith.mulf %21, %21 : vector<64x512xf32>
    %23 = arith.mulf %22, %22 : vector<64x512xf32>
    %24 = arith.mulf %23, %22 : vector<64x512xf32>
    %cst_6 = arith.constant 11.666667 : f32
    %25 = vector.broadcast %cst_6 : f32 to vector<64x512xf32>
    %26 = arith.mulf %25, %16 : vector<64x512xf32>
    %cst_7 = arith.constant 6.000000e+00 : f32
    %27 = vector.broadcast %cst_7 : f32 to vector<64x512xf32>
    %28 = arith.mulf %27, %17 : vector<64x512xf32>
    %29 = arith.addf %26, %28 : vector<64x512xf32>
    %cst_8 = arith.constant 1.000000e+00 : f32
    %30 = vector.broadcast %cst_8 : f32 to vector<64x512xf32>
    %31 = arith.addf %29, %30 : vector<64x512xf32>
    %32 = arith.mulf %24, %31 : vector<64x512xf32>
    %c0_9 = arith.constant 0 : index
    %c0_10 = arith.constant 0 : index
    %33 = vector.load %arg4[%c0_9, %c0_10] : memref<64x512xf32, #tpu.memory_space<vmem>>, vector<64x512xf32>
    tpu.vector_store %arg4[%c0_9, %c0_10], %32 {strides = array<i32>} : memref<64x512xf32, #tpu.memory_space<vmem>>, vector<64x512xf32>,
    return
  }
  func.func @transform_0(%arg0: i32, %arg1: i32) -> (i32, i32) {
    %c0_i32 = arith.constant 0 : i32
    %c0_i32_0 = arith.constant 0 : i32
    return %arg0, %c0_i32 : i32, i32
  }
  func.func @transform_1(%arg0: i32, %arg1: i32) -> (i32, i32) {
    %c0_i32 = arith.constant 0 : i32
    %c0_i32_0 = arith.constant 0 : i32
    return %c0_i32, %arg1 : i32, i32
  }
  func.func @transform_2(%arg0: i32, %arg1: i32) -> (i32, i32) {
    %c0_i32 = arith.constant 0 : i32
    return %arg0, %arg1 : i32, i32
  }
}

</mosaic_0001>

<llo_original>
// kernel: tpu_custom_call.1
$region0: #{tpu_custom_call.1}
  #allocation0 [shape = 'u32[]', space=smem, size = 0x4, offset = 0x4, fixed_abs, tag = 'smem constant byte address 0x4 - core index']
  #allocation1 [shape = 'u32[72,128]{1,0:T(1,128)}', space=vmem, size = 0x9000, scoped, tag = 'internal scratch']
  %s0 = inlined_call_operand.vmem [shape: f32[64,2], index: 0, kind: input, shape index: {}]
  %s1 = inlined_call_operand.vmem [shape: f32[3,512], index: 1, kind: input, shape index: {}]
  %s2 = inlined_call_operand.hbm [shape: f32[64,461], index: 2, kind: output, shape index: {}]
  %s3 = sld [smem:[#allocation0]]
  $region18: #{tpu_custom_call.1} parent=0
    _
  %s5 = ssub.s32 1, %s3
  %s6 = scalar_select 0, %s5, %s3
  $region1: #{tpu_custom_call.1} parent=0
    #allocation2 [shape = 'u8[131072]{0}', space=vmem, size = 0x20000, scoped, tag = 'output window, operand 0, single buffered']
    #allocation3 [shape = 's32[1]{0}', space=sflag, size = 0x4, scoped, tag = 'scoped memory for tpu_custom_call.1']
    %7 = vsyncpa [#allocation3], 0
    // Predicated region
    $region2: #{tpu_custom_call.1} parent=1 // pred_check
      _
    $region3: #{tpu_custom_call.1} parent=1 // pred_check_branch
      %9 = sbr.rel (0) target = $region5
    $region4: #{tpu_custom_call.1} parent=1 // pred_region
      _
    $region5: #{tpu_custom_call.1} parent=1 // pred_fallthru
      _
    // Predicated region
    $region6: #{tpu_custom_call.1} parent=1 // pred_check
      _
    $region7: #{tpu_custom_call.1} parent=1 // pred_check_branch
      %11 = sbr.rel (0) target = $region9
    $region8: #{tpu_custom_call.1} parent=1 // pred_region
      _
    $region9: #{tpu_custom_call.1} parent=1 // pred_fallthru
      _
    %v12 = vld [vmem:[%s0] sm:$0xff]
    %v13 = vld [vmem:[%s0 + $0x8] sm:$0xff]
    %v14 = vld [vmem:[%s0 + $0x10] sm:$0xff]
    %v15 = vld [vmem:[%s0 + $0x18] sm:$0xff]
    %v16 = vld [vmem:[%s0 + $0x20] sm:$0xff]
    %v17 = vld [vmem:[%s0 + $0x28] sm:$0xff]
    %v18 = vld [vmem:[%s0 + $0x30] sm:$0xff]
    %v19 = vld [vmem:[%s0 + $0x38] sm:$0xff]
    %v20 = vld [vmem:[%s1] ss:$4 sm:$0xf]
    %s21 = scalar_lea.vmem %s1, 1
    %v22 = vld [vmem:[%s21] ss:$4 sm:$0xf]
    %s23 = scalar_lea.vmem %s1, 2
    %v24 = vld [vmem:[%s23] ss:$4 sm:$0xf]
    %26 = vset.pattern.permute.xlu0 0
    %27 = vperm.xlu0 %26, %v12
    %v28 = vpop.permute.xlu0 %27
    %31 = vset.pattern.permute.xlu0 0
    %32 = vperm.xlu0 %31, %v13
    %v33 = vpop.permute.xlu0 %32
    %36 = vset.pattern.permute.xlu0 0
    %37 = vperm.xlu0 %36, %v14
    %v38 = vpop.permute.xlu0 %37
    %41 = vset.pattern.permute.xlu0 0
    %42 = vperm.xlu0 %41, %v15
    %v43 = vpop.permute.xlu0 %42
    %46 = vset.pattern.permute.xlu0 0
    %47 = vperm.xlu0 %46, %v16
    %v48 = vpop.permute.xlu0 %47
    %51 = vset.pattern.permute.xlu0 0
    %52 = vperm.xlu0 %51, %v17
    %v53 = vpop.permute.xlu0 %52
    %56 = vset.pattern.permute.xlu0 0
    %57 = vperm.xlu0 %56, %v18
    %v58 = vpop.permute.xlu0 %57
    %61 = vset.pattern.permute.xlu0 0
    %62 = vperm.xlu0 %61, %v19
    %v63 = vpop.permute.xlu0 %62
    %v66 = vperm.slane %v20, 0
    %v67 = vperm.slane %v20, 1
    %v68 = vperm.slane %v20, 2
    %v69 = vperm.slane %v20, 3
    %v74 = vsub.f32 %v28, %v66
    %v75 = vsub.f32 %v28, %v67
    %v76 = vsub.f32 %v28, %v68
    %v77 = vsub.f32 %v28, %v69
    %v78 = vsub.f32 %v33, %v66
    %v79 = vsub.f32 %v33, %v67
    %v80 = vsub.f32 %v33, %v68
    %v81 = vsub.f32 %v33, %v69
    %v82 = vsub.f32 %v38, %v66
    %v83 = vsub.f32 %v38, %v67
    %v84 = vsub.f32 %v38, %v68
    %v85 = vsub.f32 %v38, %v69
    %v86 = vsub.f32 %v43, %v66
    %v87 = vsub.f32 %v43, %v67
    %v88 = vsub.f32 %v43, %v68
    %v89 = vsub.f32 %v43, %v69
    %v90 = vsub.f32 %v48, %v66
    %v91 = vsub.f32 %v48, %v67
    %v92 = vsub.f32 %v48, %v68
    %v93 = vsub.f32 %v48, %v69
    %v94 = vsub.f32 %v53, %v66
    %v95 = vsub.f32 %v53, %v67
    %v96 = vsub.f32 %v53, %v68
    %v97 = vsub.f32 %v53, %v69
    %v98 = vsub.f32 %v58, %v66
    %v99 = vsub.f32 %v58, %v67
    %v100 = vsub.f32 %v58, %v68
    %v101 = vsub.f32 %v58, %v69
    %v102 = vsub.f32 %v63, %v66
    %v103 = vsub.f32 %v63, %v67
    %v104 = vsub.f32 %v63, %v68
    %v105 = vsub.f32 %v63, %v69
    %106 = vset.pattern.permute.xlu0 1
    %107 = vperm.xlu0 %106, %v12
    %v108 = vpop.permute.xlu0 %107
    %110 = vset.pattern.permute.xlu0 1
    %111 = vperm.xlu0 %110, %v13
    %v112 = vpop.permute.xlu0 %111
    %114 = vset.pattern.permute.xlu0 1
    %115 = vperm.xlu0 %114, %v14
    %v116 = vpop.permute.xlu0 %115
    %118 = vset.pattern.permute.xlu0 1
    %119 = vperm.xlu0 %118, %v15
    %v120 = vpop.permute.xlu0 %119
    %122 = vset.pattern.permute.xlu0 1
    %123 = vperm.xlu0 %122, %v16
    %v124 = vpop.permute.xlu0 %123
    %126 = vset.pattern.permute.xlu0 1
    %127 = vperm.xlu0 %126, %v17
    %v128 = vpop.permute.xlu0 %127
    %130 = vset.pattern.permute.xlu0 1
    %131 = vperm.xlu0 %130, %v18
    %v132 = vpop.permute.xlu0 %131
    %134 = vset.pattern.permute.xlu0 1
    %135 = vperm.xlu0 %134, %v19
    %v136 = vpop.permute.xlu0 %135
    %v139 = vperm.slane %v22, 0
    %v140 = vperm.slane %v22, 1
    %v141 = vperm.slane %v22, 2
    %v142 = vperm.slane %v22, 3
    %v147 = vsub.f32 %v108, %v139
    %v148 = vsub.f32 %v108, %v140
    %v149 = vsub.f32 %v108, %v141
    %v150 = vsub.f32 %v108, %v142
    %v151 = vsub.f32 %v112, %v139
    %v152 = vsub.f32 %v112, %v140
    %v153 = vsub.f32 %v112, %v141
    %v154 = vsub.f32 %v112, %v142
    %v155 = vsub.f32 %v116, %v139
    %v156 = vsub.f32 %v116, %v140
    %v157 = vsub.f32 %v116, %v141
    %v158 = vsub.f32 %v116, %v142
    %v159 = vsub.f32 %v120, %v139
    %v160 = vsub.f32 %v120, %v140
    %v161 = vsub.f32 %v120, %v141
    %v162 = vsub.f32 %v120, %v142
    %v163 = vsub.f32 %v124, %v139
    %v164 = vsub.f32 %v124, %v140
    %v165 = vsub.f32 %v124, %v141
    %v166 = vsub.f32 %v124, %v142
    %v167 = vsub.f32 %v128, %v139
    %v168 = vsub.f32 %v128, %v140
    %v169 = vsub.f32 %v128, %v141
    %v170 = vsub.f32 %v128, %v142
    %v171 = vsub.f32 %v132, %v139
    %v172 = vsub.f32 %v132, %v140
    %v173 = vsub.f32 %v132, %v141
    %v174 = vsub.f32 %v132, %v142
    %v175 = vsub.f32 %v136, %v139
    %v176 = vsub.f32 %v136, %v140
    %v177 = vsub.f32 %v136, %v141
    %v178 = vsub.f32 %v136, %v142
    %v179 = vmul.f32 %v74, %v74
    %v180 = vmul.f32 %v75, %v75
    %v181 = vmul.f32 %v76, %v76
    %v182 = vmul.f32 %v77, %v77
    %v183 = vmul.f32 %v78, %v78
    %v184 = vmul.f32 %v79, %v79
    %v185 = vmul.f32 %v80, %v80
    %v186 = vmul.f32 %v81, %v81
    %v187 = vmul.f32 %v82, %v82
    %v188 = vmul.f32 %v83, %v83
    %v189 = vmul.f32 %v84, %v84
    %v190 = vmul.f32 %v85, %v85
    %v191 = vmul.f32 %v86, %v86
    %v192 = vmul.f32 %v87, %v87
    %v193 = vmul.f32 %v88, %v88
    %v194 = vmul.f32 %v89, %v89
    %v195 = vmul.f32 %v90, %v90
    %v196 = vmul.f32 %v91, %v91
    %v197 = vmul.f32 %v92, %v92
    %v198 = vmul.f32 %v93, %v93
    %v199 = vmul.f32 %v94, %v94
    %v200 = vmul.f32 %v95, %v95
    %v201 = vmul.f32 %v96, %v96
    %v202 = vmul.f32 %v97, %v97
    %v203 = vmul.f32 %v98, %v98
    %v204 = vmul.f32 %v99, %v99
    %v205 = vmul.f32 %v100, %v100
    %v206 = vmul.f32 %v101, %v101
    %v207 = vmul.f32 %v102, %v102
    %v208 = vmul.f32 %v103, %v103
    %v209 = vmul.f32 %v104, %v104
    %v210 = vmul.f32 %v105, %v105
    %v211 = vmul.f32 %v147, %v147
    %v212 = vmul.f32 %v148, %v148
    %v213 = vmul.f32 %v149, %v149
    %v214 = vmul.f32 %v150, %v150
    %v215 = vmul.f32 %v151, %v151
    %v216 = vmul.f32 %v152, %v152
    %v217 = vmul.f32 %v153, %v153
    %v218 = vmul.f32 %v154, %v154
    %v219 = vmul.f32 %v155, %v155
    %v220 = vmul.f32 %v156, %v156
    %v221 = vmul.f32 %v157, %v157
    %v222 = vmul.f32 %v158, %v158
    %v223 = vmul.f32 %v159, %v159
    %v224 = vmul.f32 %v160, %v160
    %v225 = vmul.f32 %v161, %v161
    %v226 = vmul.f32 %v162, %v162
    %v227 = vmul.f32 %v163, %v163
    %v228 = vmul.f32 %v164, %v164
    %v229 = vmul.f32 %v165, %v165
    %v230 = vmul.f32 %v166, %v166
    %v231 = vmul.f32 %v167, %v167
    %v232 = vmul.f32 %v168, %v168
    %v233 = vmul.f32 %v169, %v169
    %v234 = vmul.f32 %v170, %v170
    %v235 = vmul.f32 %v171, %v171
    %v236 = vmul.f32 %v172, %v172
    %v237 = vmul.f32 %v173, %v173
    %v238 = vmul.f32 %v174, %v174
    %v239 = vmul.f32 %v175, %v175
    %v240 = vmul.f32 %v176, %v176
    %v241 = vmul.f32 %v177, %v177
    %v242 = vmul.f32 %v178, %v178
    %v243 = vadd.f32 %v179, %v211
    %v244 = vadd.f32 %v180, %v212
    %v245 = vadd.f32 %v181, %v213
    %v246 = vadd.f32 %v182, %v214
    %v247 = vadd.f32 %v183, %v215
    %v248 = vadd.f32 %v184, %v216
    %v249 = vadd.f32 %v185, %v217
    %v250 = vadd.f32 %v186, %v218
    %v251 = vadd.f32 %v187, %v219
    %v252 = vadd.f32 %v188, %v220
    %v253 = vadd.f32 %v189, %v221
    %v254 = vadd.f32 %v190, %v222
    %v255 = vadd.f32 %v191, %v223
    %v256 = vadd.f32 %v192, %v224
    %v257 = vadd.f32 %v193, %v225
    %v258 = vadd.f32 %v194, %v226
    %v259 = vadd.f32 %v195, %v227
    %v260 = vadd.f32 %v196, %v228
    %v261 = vadd.f32 %v197, %v229
    %v262 = vadd.f32 %v198, %v230
    %v263 = vadd.f32 %v199, %v231
    %v264 = vadd.f32 %v200, %v232
    %v265 = vadd.f32 %v201, %v233
    %v266 = vadd.f32 %v202, %v234
    %v267 = vadd.f32 %v203, %v235
    %v268 = vadd.f32 %v204, %v236
    %v269 = vadd.f32 %v205, %v237
    %v270 = vadd.f32 %v206, %v238
    %v271 = vadd.f32 %v207, %v239
    %v272 = vadd.f32 %v208, %v240
    %v273 = vadd.f32 %v209, %v241
    %v274 = vadd.f32 %v210, %v242
    %v276 = vperm.slane %v24, 0
    %v277 = vperm.slane %v24, 1
    %v278 = vperm.slane %v24, 2
    %v279 = vperm.slane %v24, 3
    %v284 = vmul.f32 %v243, %v276
    %v285 = vmul.f32 %v244, %v277
    %v286 = vmul.f32 %v245, %v278
    %v287 = vmul.f32 %v246, %v279
    %v288 = vmul.f32 %v247, %v276
    %v289 = vmul.f32 %v248, %v277
    %v290 = vmul.f32 %v249, %v278
    %v291 = vmul.f32 %v250, %v279
    %v292 = vmul.f32 %v251, %v276
    %v293 = vmul.f32 %v252, %v277
    %v294 = vmul.f32 %v253, %v278
    %v295 = vmul.f32 %v254, %v279
    %v296 = vmul.f32 %v255, %v276
    %v297 = vmul.f32 %v256, %v277
    %v298 = vmul.f32 %v257, %v278
    %v299 = vmul.f32 %v258, %v279
    %v300 = vmul.f32 %v259, %v276
    %v301 = vmul.f32 %v260, %v277
    %v302 = vmul.f32 %v261, %v278
    %v303 = vmul.f32 %v262, %v279
    %v304 = vmul.f32 %v263, %v276
    %v305 = vmul.f32 %v264, %v277
    %v306 = vmul.f32 %v265, %v278
    %v307 = vmul.f32 %v266, %v279
    %v308 = vmul.f32 %v267, %v276
    %v309 = vmul.f32 %v268, %v277
    %v310 = vmul.f32 %v269, %v278
    %v311 = vmul.f32 %v270, %v279
    %v312 = vmul.f32 %v271, %v276
    %v313 = vmul.f32 %v272, %v277
    %v314 = vmul.f32 %v273, %v278
    %v315 = vmul.f32 %v274, %v279
    %v316 = vrsqrt.pop %v284
    %v317 = vmul.f32 %v316, %v284
    %v318 = vmul.f32 %v317, %v316
    %v319 = vmul.f32 0.5, %v318
    %v320 = vsub.f32 1.5, %v319
    %v321 = vmul.f32 %v316, %v320
    %v322 = vmul.f32 %v284, %v321
    %vm323 = vcmp.eq.f32.partialorder %v284, inf
    %v324 = vsel %vm323, %v284, %v322
    %vm325 = vcmp.eq.f32.partialorder %v284, 0.0
    %v326 = vand.u32 %v284, 2147483648
    %v327 = vsel %vm325, %v326, %v324
    %v328 = vrsqrt.pop %v285
    %v329 = vmul.f32 %v328, %v285
    %v330 = vmul.f32 %v329, %v328
    %v331 = vmul.f32 0.5, %v330
    %v332 = vsub.f32 1.5, %v331
    %v333 = vmul.f32 %v328, %v332
    %v334 = vmul.f32 %v285, %v333
    %vm335 = vcmp.eq.f32.partialorder %v285, inf
    %v336 = vsel %vm335, %v285, %v334
    %vm337 = vcmp.eq.f32.partialorder %v285, 0.0
    %v338 = vand.u32 %v285, 2147483648
    %v339 = vsel %vm337, %v338, %v336
    %v340 = vrsqrt.pop %v286
    %v341 = vmul.f32 %v340, %v286
    %v342 = vmul.f32 %v341, %v340
    %v343 = vmul.f32 0.5, %v342
    %v344 = vsub.f32 1.5, %v343
    %v345 = vmul.f32 %v340, %v344
    %v346 = vmul.f32 %v286, %v345
    %vm347 = vcmp.eq.f32.partialorder %v286, inf
    %v348 = vsel %vm347, %v286, %v346
    %vm349 = vcmp.eq.f32.partialorder %v286, 0.0
    %v350 = vand.u32 %v286, 2147483648
    %v351 = vsel %vm349, %v350, %v348
    %v352 = vrsqrt.pop %v287
    %v353 = vmul.f32 %v352, %v287
    %v354 = vmul.f32 %v353, %v352
    %v355 = vmul.f32 0.5, %v354
    %v356 = vsub.f32 1.5, %v355
    %v357 = vmul.f32 %v352, %v356
    %v358 = vmul.f32 %v287, %v357
    %vm359 = vcmp.eq.f32.partialorder %v287, inf
    %v360 = vsel %vm359, %v287, %v358
    %vm361 = vcmp.eq.f32.partialorder %v287, 0.0
    %v362 = vand.u32 %v287, 2147483648
    %v363 = vsel %vm361, %v362, %v360
    %v364 = vrsqrt.pop %v288
    %v365 = vmul.f32 %v364, %v288
    %v366 = vmul.f32 %v365, %v364
    %v367 = vmul.f32 0.5, %v366
    %v368 = vsub.f32 1.5, %v367
    %v369 = vmul.f32 %v364, %v368
    %v370 = vmul.f32 %v288, %v369
    %vm371 = vcmp.eq.f32.partialorder %v288, inf
    %v372 = vsel %vm371, %v288, %v370
    %vm373 = vcmp.eq.f32.partialorder %v288, 0.0
    %v374 = vand.u32 %v288, 2147483648
    %v375 = vsel %vm373, %v374, %v372
    %v376 = vrsqrt.pop %v289
    %v377 = vmul.f32 %v376, %v289
    %v378 = vmul.f32 %v377, %v376
    %v379 = vmul.f32 0.5, %v378
    %v380 = vsub.f32 1.5, %v379
    %v381 = vmul.f32 %v376, %v380
    %v382 = vmul.f32 %v289, %v381
    %vm383 = vcmp.eq.f32.partialorder %v289, inf
    %v384 = vsel %vm383, %v289, %v382
    %vm385 = vcmp.eq.f32.partialorder %v289, 0.0
    %v386 = vand.u32 %v289, 2147483648
    %v387 = vsel %vm385, %v386, %v384
    %v388 = vrsqrt.pop %v290
    %v389 = vmul.f32 %v388, %v290
    %v390 = vmul.f32 %v389, %v388
    %v391 = vmul.f32 0.5, %v390
    %v392 = vsub.f32 1.5, %v391
    %v393 = vmul.f32 %v388, %v392
    %v394 = vmul.f32 %v290, %v393
    %vm395 = vcmp.eq.f32.partialorder %v290, inf
    %v396 = vsel %vm395, %v290, %v394
    %vm397 = vcmp.eq.f32.partialorder %v290, 0.0
    %v398 = vand.u32 %v290, 2147483648
    %v399 = vsel %vm397, %v398, %v396
    %v400 = vrsqrt.pop %v291
    %v401 = vmul.f32 %v400, %v291
    %v402 = vmul.f32 %v401, %v400
    %v403 = vmul.f32 0.5, %v402
    %v404 = vsub.f32 1.5, %v403
    %v405 = vmul.f32 %v400, %v404
    %v406 = vmul.f32 %v291, %v405
    %vm407 = vcmp.eq.f32.partialorder %v291, inf
    %v408 = vsel %vm407, %v291, %v406
    %vm409 = vcmp.eq.f32.partialorder %v291, 0.0
    %v410 = vand.u32 %v291, 2147483648
    %v411 = vsel %vm409, %v410, %v408
    %v412 = vrsqrt.pop %v292
    %v413 = vmul.f32 %v412, %v292
    %v414 = vmul.f32 %v413, %v412
    %v415 = vmul.f32 0.5, %v414
    %v416 = vsub.f32 1.5, %v415
    %v417 = vmul.f32 %v412, %v416
    %v418 = vmul.f32 %v292, %v417
    %vm419 = vcmp.eq.f32.partialorder %v292, inf
    %v420 = vsel %vm419, %v292, %v418
    %vm421 = vcmp.eq.f32.partialorder %v292, 0.0
    %v422 = vand.u32 %v292, 2147483648
    %v423 = vsel %vm421, %v422, %v420
    %v424 = vrsqrt.pop %v293
    %v425 = vmul.f32 %v424, %v293
    %v426 = vmul.f32 %v425, %v424
    %v427 = vmul.f32 0.5, %v426
    %v428 = vsub.f32 1.5, %v427
    %v429 = vmul.f32 %v424, %v428
    %v430 = vmul.f32 %v293, %v429
    %vm431 = vcmp.eq.f32.partialorder %v293, inf
    %v432 = vsel %vm431, %v293, %v430
    %vm433 = vcmp.eq.f32.partialorder %v293, 0.0
    %v434 = vand.u32 %v293, 2147483648
    %v435 = vsel %vm433, %v434, %v432
    %v436 = vrsqrt.pop %v294
    %v437 = vmul.f32 %v436, %v294
    %v438 = vmul.f32 %v437, %v436
    %v439 = vmul.f32 0.5, %v438
    %v440 = vsub.f32 1.5, %v439
    %v441 = vmul.f32 %v436, %v440
    %v442 = vmul.f32 %v294, %v441
    %vm443 = vcmp.eq.f32.partialorder %v294, inf
    %v444 = vsel %vm443, %v294, %v442
    %vm445 = vcmp.eq.f32.partialorder %v294, 0.0
    %v446 = vand.u32 %v294, 2147483648
    %v447 = vsel %vm445, %v446, %v444
    %v448 = vrsqrt.pop %v295
    %v449 = vmul.f32 %v448, %v295
    %v450 = vmul.f32 %v449, %v448
    %v451 = vmul.f32 0.5, %v450
    %v452 = vsub.f32 1.5, %v451
    %v453 = vmul.f32 %v448, %v452
    %v454 = vmul.f32 %v295, %v453
    %vm455 = vcmp.eq.f32.partialorder %v295, inf
    %v456 = vsel %vm455, %v295, %v454
    %vm457 = vcmp.eq.f32.partialorder %v295, 0.0
    %v458 = vand.u32 %v295, 2147483648
    %v459 = vsel %vm457, %v458, %v456
    %v460 = vrsqrt.pop %v296
    %v461 = vmul.f32 %v460, %v296
    %v462 = vmul.f32 %v461, %v460
    %v463 = vmul.f32 0.5, %v462
    %v464 = vsub.f32 1.5, %v463
    %v465 = vmul.f32 %v460, %v464
    %v466 = vmul.f32 %v296, %v465
    %vm467 = vcmp.eq.f32.partialorder %v296, inf
    %v468 = vsel %vm467, %v296, %v466
    %vm469 = vcmp.eq.f32.partialorder %v296, 0.0
    %v470 = vand.u32 %v296, 2147483648
    %v471 = vsel %vm469, %v470, %v468
    %v472 = vrsqrt.pop %v297
    %v473 = vmul.f32 %v472, %v297
    %v474 = vmul.f32 %v473, %v472
    %v475 = vmul.f32 0.5, %v474
    %v476 = vsub.f32 1.5, %v475
    %v477 = vmul.f32 %v472, %v476
    %v478 = vmul.f32 %v297, %v477
    %vm479 = vcmp.eq.f32.partialorder %v297, inf
    %v480 = vsel %vm479, %v297, %v478
    %vm481 = vcmp.eq.f32.partialorder %v297, 0.0
    %v482 = vand.u32 %v297, 2147483648
    %v483 = vsel %vm481, %v482, %v480
    %v484 = vrsqrt.pop %v298
    %v485 = vmul.f32 %v484, %v298
    %v486 = vmul.f32 %v485, %v484
    %v487 = vmul.f32 0.5, %v486
    %v488 = vsub.f32 1.5, %v487
    %v489 = vmul.f32 %v484, %v488
    %v490 = vmul.f32 %v298, %v489
    %vm491 = vcmp.eq.f32.partialorder %v298, inf
    %v492 = vsel %vm491, %v298, %v490
    %vm493 = vcmp.eq.f32.partialorder %v298, 0.0
    %v494 = vand.u32 %v298, 2147483648
    %v495 = vsel %vm493, %v494, %v492
    %v496 = vrsqrt.pop %v299
    %v497 = vmul.f32 %v496, %v299
    %v498 = vmul.f32 %v497, %v496
    %v499 = vmul.f32 0.5, %v498
    %v500 = vsub.f32 1.5, %v499
    %v501 = vmul.f32 %v496, %v500
    %v502 = vmul.f32 %v299, %v501
    %vm503 = vcmp.eq.f32.partialorder %v299, inf
    %v504 = vsel %vm503, %v299, %v502
    %vm505 = vcmp.eq.f32.partialorder %v299, 0.0
    %v506 = vand.u32 %v299, 2147483648
    %v507 = vsel %vm505, %v506, %v504
    %v508 = vrsqrt.pop %v300
    %v509 = vmul.f32 %v508, %v300
    %v510 = vmul.f32 %v509, %v508
    %v511 = vmul.f32 0.5, %v510
    %v512 = vsub.f32 1.5, %v511
    %v513 = vmul.f32 %v508, %v512
    %v514 = vmul.f32 %v300, %v513
    %vm515 = vcmp.eq.f32.partialorder %v300, inf
    %v516 = vsel %vm515, %v300, %v514
    %vm517 = vcmp.eq.f32.partialorder %v300, 0.0
    %v518 = vand.u32 %v300, 2147483648
    %v519 = vsel %vm517, %v518, %v516
    %v520 = vrsqrt.pop %v301
    %v521 = vmul.f32 %v520, %v301
    %v522 = vmul.f32 %v521, %v520
    %v523 = vmul.f32 0.5, %v522
    %v524 = vsub.f32 1.5, %v523
    %v525 = vmul.f32 %v520, %v524
    %v526 = vmul.f32 %v301, %v525
    %vm527 = vcmp.eq.f32.partialorder %v301, inf
    %v528 = vsel %vm527, %v301, %v526
    %vm529 = vcmp.eq.f32.partialorder %v301, 0.0
    %v530 = vand.u32 %v301, 2147483648
    %v531 = vsel %vm529, %v530, %v528
    %v532 = vrsqrt.pop %v302
    %v533 = vmul.f32 %v532, %v302
    %v534 = vmul.f32 %v533, %v532
    %v535 = vmul.f32 0.5, %v534
    %v536 = vsub.f32 1.5, %v535
    %v537 = vmul.f32 %v532, %v536
    %v538 = vmul.f32 %v302, %v537
    %vm539 = vcmp.eq.f32.partialorder %v302, inf
    %v540 = vsel %vm539, %v302, %v538
    %vm541 = vcmp.eq.f32.partialorder %v302, 0.0
    %v542 = vand.u32 %v302, 2147483648
    %v543 = vsel %vm541, %v542, %v540
    %v544 = vrsqrt.pop %v303
    %v545 = vmul.f32 %v544, %v303
    %v546 = vmul.f32 %v545, %v544
    %v547 = vmul.f32 0.5, %v546
    %v548 = vsub.f32 1.5, %v547
    %v549 = vmul.f32 %v544, %v548
    %v550 = vmul.f32 %v303, %v549
    %vm551 = vcmp.eq.f32.partialorder %v303, inf
    %v552 = vsel %vm551, %v303, %v550
    %vm553 = vcmp.eq.f32.partialorder %v303, 0.0
    %v554 = vand.u32 %v303, 2147483648
    %v555 = vsel %vm553, %v554, %v552
    %v556 = vrsqrt.pop %v304
    %v557 = vmul.f32 %v556, %v304
    %v558 = vmul.f32 %v557, %v556
    %v559 = vmul.f32 0.5, %v558
    %v560 = vsub.f32 1.5, %v559
    %v561 = vmul.f32 %v556, %v560
    %v562 = vmul.f32 %v304, %v561
    %vm563 = vcmp.eq.f32.partialorder %v304, inf
    %v564 = vsel %vm563, %v304, %v562
    %vm565 = vcmp.eq.f32.partialorder %v304, 0.0
    %v566 = vand.u32 %v304, 2147483648
    %v567 = vsel %vm565, %v566, %v564
    %v568 = vrsqrt.pop %v305
    %v569 = vmul.f32 %v568, %v305
    %v570 = vmul.f32 %v569, %v568
    %v571 = vmul.f32 0.5, %v570
    %v572 = vsub.f32 1.5, %v571
    %v573 = vmul.f32 %v568, %v572
    %v574 = vmul.f32 %v305, %v573
    %vm575 = vcmp.eq.f32.partialorder %v305, inf
    %v576 = vsel %vm575, %v305, %v574
    %vm577 = vcmp.eq.f32.partialorder %v305, 0.0
    %v578 = vand.u32 %v305, 2147483648
    %v579 = vsel %vm577, %v578, %v576
    %v580 = vrsqrt.pop %v306
    %v581 = vmul.f32 %v580, %v306
    %v582 = vmul.f32 %v581, %v580
    %v583 = vmul.f32 0.5, %v582
    %v584 = vsub.f32 1.5, %v583
    %v585 = vmul.f32 %v580, %v584
    %v586 = vmul.f32 %v306, %v585
    %vm587 = vcmp.eq.f32.partialorder %v306, inf
    %v588 = vsel %vm587, %v306, %v586
    %vm589 = vcmp.eq.f32.partialorder %v306, 0.0
    %v590 = vand.u32 %v306, 2147483648
    %v591 = vsel %vm589, %v590, %v588
    %v592 = vrsqrt.pop %v307
    %v593 = vmul.f32 %v592, %v307
    %v594 = vmul.f32 %v593, %v592
    %v595 = vmul.f32 0.5, %v594
    %v596 = vsub.f32 1.5, %v595
    %v597 = vmul.f32 %v592, %v596
    %v598 = vmul.f32 %v307, %v597
    %vm599 = vcmp.eq.f32.partialorder %v307, inf
    %v600 = vsel %vm599, %v307, %v598
    %vm601 = vcmp.eq.f32.partialorder %v307, 0.0
    %v602 = vand.u32 %v307, 2147483648
    %v603 = vsel %vm601, %v602, %v600
    %v604 = vrsqrt.pop %v308
    %v605 = vmul.f32 %v604, %v308
    %v606 = vmul.f32 %v605, %v604
    %v607 = vmul.f32 0.5, %v606
    %v608 = vsub.f32 1.5, %v607
    %v609 = vmul.f32 %v604, %v608
    %v610 = vmul.f32 %v308, %v609
    %vm611 = vcmp.eq.f32.partialorder %v308, inf
    %v612 = vsel %vm611, %v308, %v610
    %vm613 = vcmp.eq.f32.partialorder %v308, 0.0
    %v614 = vand.u32 %v308, 2147483648
    %v615 = vsel %vm613, %v614, %v612
    %v616 = vrsqrt.pop %v309
    %v617 = vmul.f32 %v616, %v309
    %v618 = vmul.f32 %v617, %v616
    %v619 = vmul.f32 0.5, %v618
    %v620 = vsub.f32 1.5, %v619
    %v621 = vmul.f32 %v616, %v620
    %v622 = vmul.f32 %v309, %v621
    %vm623 = vcmp.eq.f32.partialorder %v309, inf
    %v624 = vsel %vm623, %v309, %v622
    %vm625 = vcmp.eq.f32.partialorder %v309, 0.0
    %v626 = vand.u32 %v309, 2147483648
    %v627 = vsel %vm625, %v626, %v624
    %v628 = vrsqrt.pop %v310
    %v629 = vmul.f32 %v628, %v310
    %v630 = vmul.f32 %v629, %v628
    %v631 = vmul.f32 0.5, %v630
    %v632 = vsub.f32 1.5, %v631
    %v633 = vmul.f32 %v628, %v632
    %v634 = vmul.f32 %v310, %v633
    %vm635 = vcmp.eq.f32.partialorder %v310, inf
    %v636 = vsel %vm635, %v310, %v634
    %vm637 = vcmp.eq.f32.partialorder %v310, 0.0
    %v638 = vand.u32 %v310, 2147483648
    %v639 = vsel %vm637, %v638, %v636
    %v640 = vrsqrt.pop %v311
    %v641 = vmul.f32 %v640, %v311
    %v642 = vmul.f32 %v641, %v640
    %v643 = vmul.f32 0.5, %v642
    %v644 = vsub.f32 1.5, %v643
    %v645 = vmul.f32 %v640, %v644
    %v646 = vmul.f32 %v311, %v645
    %vm647 = vcmp.eq.f32.partialorder %v311, inf
    %v648 = vsel %vm647, %v311, %v646
    %vm649 = vcmp.eq.f32.partialorder %v311, 0.0
    %v650 = vand.u32 %v311, 2147483648
    %v651 = vsel %vm649, %v650, %v648
    %v652 = vrsqrt.pop %v312
    %v653 = vmul.f32 %v652, %v312
    %v654 = vmul.f32 %v653, %v652
    %v655 = vmul.f32 0.5, %v654
    %v656 = vsub.f32 1.5, %v655
    %v657 = vmul.f32 %v652, %v656
    %v658 = vmul.f32 %v312, %v657
    %vm659 = vcmp.eq.f32.partialorder %v312, inf
    %v660 = vsel %vm659, %v312, %v658
    %vm661 = vcmp.eq.f32.partialorder %v312, 0.0
    %v662 = vand.u32 %v312, 2147483648
    %v663 = vsel %vm661, %v662, %v660
    %v664 = vrsqrt.pop %v313
    %v665 = vmul.f32 %v664, %v313
    %v666 = vmul.f32 %v665, %v664
    %v667 = vmul.f32 0.5, %v666
    %v668 = vsub.f32 1.5, %v667
    %v669 = vmul.f32 %v664, %v668
    %v670 = vmul.f32 %v313, %v669
    %vm671 = vcmp.eq.f32.partialorder %v313, inf
    %v672 = vsel %vm671, %v313, %v670
    %vm673 = vcmp.eq.f32.partialorder %v313, 0.0
    %v674 = vand.u32 %v313, 2147483648
    %v675 = vsel %vm673, %v674, %v672
    %v676 = vrsqrt.pop %v314
    %v677 = vmul.f32 %v676, %v314
    %v678 = vmul.f32 %v677, %v676
    %v679 = vmul.f32 0.5, %v678
    %v680 = vsub.f32 1.5, %v679
    %v681 = vmul.f32 %v676, %v680
    %v682 = vmul.f32 %v314, %v681
    %vm683 = vcmp.eq.f32.partialorder %v314, inf
    %v684 = vsel %vm683, %v314, %v682
    %vm685 = vcmp.eq.f32.partialorder %v314, 0.0
    %v686 = vand.u32 %v314, 2147483648
    %v687 = vsel %vm685, %v686, %v684
    %v688 = vrsqrt.pop %v315
    %v689 = vmul.f32 %v688, %v315
    %v690 = vmul.f32 %v689, %v688
    %v691 = vmul.f32 0.5, %v690
    %v692 = vsub.f32 1.5, %v691
    %v693 = vmul.f32 %v688, %v692
    %v694 = vmul.f32 %v315, %v693
    %vm695 = vcmp.eq.f32.partialorder %v315, inf
    %v696 = vsel %vm695, %v315, %v694
    %vm697 = vcmp.eq.f32.partialorder %v315, 0.0
    %v698 = vand.u32 %v315, 2147483648
    %v699 = vsel %vm697, %v698, %v696
    %v700 = vsub.f32 1.0, %v327
    %v701 = vsub.f32 1.0, %v339
    %v702 = vsub.f32 1.0, %v351
    %v703 = vsub.f32 1.0, %v363
    %v704 = vsub.f32 1.0, %v375
    %v705 = vsub.f32 1.0, %v387
    %v706 = vsub.f32 1.0, %v399
    %v707 = vsub.f32 1.0, %v411
    %v708 = vsub.f32 1.0, %v423
    %v709 = vsub.f32 1.0, %v435
    %v710 = vsub.f32 1.0, %v447
    %v711 = vsub.f32 1.0, %v459
    %v712 = vsub.f32 1.0, %v471
    %v713 = vsub.f32 1.0, %v483
    %v714 = vsub.f32 1.0, %v495
    %v715 = vsub.f32 1.0, %v507
    %v716 = vsub.f32 1.0, %v519
    %v717 = vsub.f32 1.0, %v531
    %v718 = vsub.f32 1.0, %v543
    %v719 = vsub.f32 1.0, %v555
    %v720 = vsub.f32 1.0, %v567
    %v721 = vsub.f32 1.0, %v579
    %v722 = vsub.f32 1.0, %v591
    %v723 = vsub.f32 1.0, %v603
    %v724 = vsub.f32 1.0, %v615
    %v725 = vsub.f32 1.0, %v627
    %v726 = vsub.f32 1.0, %v639
    %v727 = vsub.f32 1.0, %v651
    %v728 = vsub.f32 1.0, %v663
    %v729 = vsub.f32 1.0, %v675
    %v730 = vsub.f32 1.0, %v687
    %v731 = vsub.f32 1.0, %v699
    %v732 = vmax.f32 %v700, 0.0
    %v733 = vmax.f32 %v701, 0.0
    %v734 = vmax.f32 %v702, 0.0
    %v735 = vmax.f32 %v703, 0.0
    %v736 = vmax.f32 %v704, 0.0
    %v737 = vmax.f32 %v705, 0.0
    %v738 = vmax.f32 %v706, 0.0
    %v739 = vmax.f32 %v707, 0.0
    %v740 = vmax.f32 %v708, 0.0
    %v741 = vmax.f32 %v709, 0.0
    %v742 = vmax.f32 %v710, 0.0
    %v743 = vmax.f32 %v711, 0.0
    %v744 = vmax.f32 %v712, 0.0
    %v745 = vmax.f32 %v713, 0.0
    %v746 = vmax.f32 %v714, 0.0
    %v747 = vmax.f32 %v715, 0.0
    %v748 = vmax.f32 %v716, 0.0
    %v749 = vmax.f32 %v717, 0.0
    %v750 = vmax.f32 %v718, 0.0
    %v751 = vmax.f32 %v719, 0.0
    %v752 = vmax.f32 %v720, 0.0
    %v753 = vmax.f32 %v721, 0.0
    %v754 = vmax.f32 %v722, 0.0
    %v755 = vmax.f32 %v723, 0.0
    %v756 = vmax.f32 %v724, 0.0
    %v757 = vmax.f32 %v725, 0.0
    %v758 = vmax.f32 %v726, 0.0
    %v759 = vmax.f32 %v727, 0.0
    %v760 = vmax.f32 %v728, 0.0
    %v761 = vmax.f32 %v729, 0.0
    %v762 = vmax.f32 %v730, 0.0
    %v763 = vmax.f32 %v731, 0.0
    %v764 = vmul.f32 %v732, %v732
    %v765 = vmul.f32 %v733, %v733
    %v766 = vmul.f32 %v734, %v734
    %v767 = vmul.f32 %v735, %v735
    %v768 = vmul.f32 %v736, %v736
    %v769 = vmul.f32 %v737, %v737
    %v770 = vmul.f32 %v738, %v738
    %v771 = vmul.f32 %v739, %v739
    %v772 = vmul.f32 %v740, %v740
    %v773 = vmul.f32 %v741, %v741
    %v774 = vmul.f32 %v742, %v742
    %v775 = vmul.f32 %v743, %v743
    %v776 = vmul.f32 %v744, %v744
    %v777 = vmul.f32 %v745, %v745
    %v778 = vmul.f32 %v746, %v746
    %v779 = vmul.f32 %v747, %v747
    %v780 = vmul.f32 %v748, %v748
    %v781 = vmul.f32 %v749, %v749
    %v782 = vmul.f32 %v750, %v750
    %v783 = vmul.f32 %v751, %v751
    %v784 = vmul.f32 %v752, %v752
    %v785 = vmul.f32 %v753, %v753
    %v786 = vmul.f32 %v754, %v754
    %v787 = vmul.f32 %v755, %v755
    %v788 = vmul.f32 %v756, %v756
    %v789 = vmul.f32 %v757, %v757
    %v790 = vmul.f32 %v758, %v758
    %v791 = vmul.f32 %v759, %v759
    %v792 = vmul.f32 %v760, %v760
    %v793 = vmul.f32 %v761, %v761
    %v794 = vmul.f32 %v762, %v762
    %v795 = vmul.f32 %v763, %v763
    %v796 = vmul.f32 %v764, %v764
    %v797 = vmul.f32 %v765, %v765
    %v798 = vmul.f32 %v766, %v766
    %v799 = vmul.f32 %v767, %v767
    %v800 = vmul.f32 %v768, %v768
    %v801 = vmul.f32 %v769, %v769
    %v802 = vmul.f32 %v770, %v770
    %v803 = vmul.f32 %v771, %v771
    %v804 = vmul.f32 %v772, %v772
    %v805 = vmul.f32 %v773, %v773
    %v806 = vmul.f32 %v774, %v774
    %v807 = vmul.f32 %v775, %v775
    %v808 = vmul.f32 %v776, %v776
    %v809 = vmul.f32 %v777, %v777
    %v810 = vmul.f32 %v778, %v778
    %v811 = vmul.f32 %v779, %v779
    %v812 = vmul.f32 %v780, %v780
    %v813 = vmul.f32 %v781, %v781
    %v814 = vmul.f32 %v782, %v782
    %v815 = vmul.f32 %v783, %v783
    %v816 = vmul.f32 %v784, %v784
    %v817 = vmul.f32 %v785, %v785
    %v818 = vmul.f32 %v786, %v786
    %v819 = vmul.f32 %v787, %v787
    %v820 = vmul.f32 %v788, %v788
    %v821 = vmul.f32 %v789, %v789
    %v822 = vmul.f32 %v790, %v790
    %v823 = vmul.f32 %v791, %v791
    %v824 = vmul.f32 %v792, %v792
    %v825 = vmul.f32 %v793, %v793
    %v826 = vmul.f32 %v794, %v794
    %v827 = vmul.f32 %v795, %v795
    %v828 = vmul.f32 %v796, %v764
    %v829 = vmul.f32 %v797, %v765
    %v830 = vmul.f32 %v798, %v766
    %v831 = vmul.f32 %v799, %v767
    %v832 = vmul.f32 %v800, %v768
    %v833 = vmul.f32 %v801, %v769
    %v834 = vmul.f32 %v802, %v770
    %v835 = vmul.f32 %v803, %v771
    %v836 = vmul.f32 %v804, %v772
    %v837 = vmul.f32 %v805, %v773
    %v838 = vmul.f32 %v806, %v774
    %v839 = vmul.f32 %v807, %v775
    %v840 = vmul.f32 %v808, %v776
    %v841 = vmul.f32 %v809, %v777
    %v842 = vmul.f32 %v810, %v778
    %v843 = vmul.f32 %v811, %v779
    %v844 = vmul.f32 %v812, %v780
    %v845 = vmul.f32 %v813, %v781
    %v846 = vmul.f32 %v814, %v782
    %v847 = vmul.f32 %v815, %v783
    %v848 = vmul.f32 %v816, %v784
    %v849 = vmul.f32 %v817, %v785
    %v850 = vmul.f32 %v818, %v786
    %v851 = vmul.f32 %v819, %v787
    %v852 = vmul.f32 %v820, %v788
    %v853 = vmul.f32 %v821, %v789
    %v854 = vmul.f32 %v822, %v790
    %v855 = vmul.f32 %v823, %v791
    %v856 = vmul.f32 %v824, %v792
    %v857 = vmul.f32 %v825, %v793
    %v858 = vmul.f32 %v826, %v794
    %v859 = vmul.f32 %v827, %v795
    %v860 = vmul.f32 %v284, 11.666667
    %v861 = vmul.f32 %v285, 11.666667
    %v862 = vmul.f32 %v286, 11.666667
    %v863 = vmul.f32 %v287, 11.666667
    %v864 = vmul.f32 %v288, 11.666667
    %v865 = vmul.f32 %v289, 11.666667
    %v866 = vmul.f32 %v290, 11.666667
    %v867 = vmul.f32 %v291, 11.666667
    %v868 = vmul.f32 %v292, 11.666667
    %v869 = vmul.f32 %v293, 11.666667
    %v870 = vmul.f32 %v294, 11.666667
    %v871 = vmul.f32 %v295, 11.666667
    %v872 = vmul.f32 %v296, 11.666667
    %v873 = vmul.f32 %v297, 11.666667
    %v874 = vmul.f32 %v298, 11.666667
    %v875 = vmul.f32 %v299, 11.666667
    %v876 = vmul.f32 %v300, 11.666667
    %v877 = vmul.f32 %v301, 11.666667
    %v878 = vmul.f32 %v302, 11.666667
    %v879 = vmul.f32 %v303, 11.666667
    %v880 = vmul.f32 %v304, 11.666667
    %v881 = vmul.f32 %v305, 11.666667
    %v882 = vmul.f32 %v306, 11.666667
    %v883 = vmul.f32 %v307, 11.666667
    %v884 = vmul.f32 %v308, 11.666667
    %v885 = vmul.f32 %v309, 11.666667
    %v886 = vmul.f32 %v310, 11.666667
    %v887 = vmul.f32 %v311, 11.666667
    %v888 = vmul.f32 %v312, 11.666667
    %v889 = vmul.f32 %v313, 11.666667
    %v890 = vmul.f32 %v314, 11.666667
    %v891 = vmul.f32 %v315, 11.666667
    %v892 = vmul.f32 %v327, 6.0
    %v893 = vmul.f32 %v339, 6.0
    %v894 = vmul.f32 %v351, 6.0
    %v895 = vmul.f32 %v363, 6.0
    %v896 = vmul.f32 %v375, 6.0
    %v897 = vmul.f32 %v387, 6.0
    %v898 = vmul.f32 %v399, 6.0
    %v899 = vmul.f32 %v411, 6.0
    %v900 = vmul.f32 %v423, 6.0
    %v901 = vmul.f32 %v435, 6.0
    %v902 = vmul.f32 %v447, 6.0
    %v903 = vmul.f32 %v459, 6.0
    %v904 = vmul.f32 %v471, 6.0
    %v905 = vmul.f32 %v483, 6.0
    %v906 = vmul.f32 %v495, 6.0
    %v907 = vmul.f32 %v507, 6.0
    %v908 = vmul.f32 %v519, 6.0
    %v909 = vmul.f32 %v531, 6.0
    %v910 = vmul.f32 %v543, 6.0
    %v911 = vmul.f32 %v555, 6.0
    %v912 = vmul.f32 %v567, 6.0
    %v913 = vmul.f32 %v579, 6.0
    %v914 = vmul.f32 %v591, 6.0
    %v915 = vmul.f32 %v603, 6.0
    %v916 = vmul.f32 %v615, 6.0
    %v917 = vmul.f32 %v627, 6.0
    %v918 = vmul.f32 %v639, 6.0
    %v919 = vmul.f32 %v651, 6.0
    %v920 = vmul.f32 %v663, 6.0
    %v921 = vmul.f32 %v675, 6.0
    %v922 = vmul.f32 %v687, 6.0
    %v923 = vmul.f32 %v699, 6.0
    %v924 = vadd.f32 %v860, %v892
    %v925 = vadd.f32 %v861, %v893
    %v926 = vadd.f32 %v862, %v894
    %v927 = vadd.f32 %v863, %v895
    %v928 = vadd.f32 %v864, %v896
    %v929 = vadd.f32 %v865, %v897
    %v930 = vadd.f32 %v866, %v898
    %v931 = vadd.f32 %v867, %v899
    %v932 = vadd.f32 %v868, %v900
    %v933 = vadd.f32 %v869, %v901
    %v934 = vadd.f32 %v870, %v902
    %v935 = vadd.f32 %v871, %v903
    %v936 = vadd.f32 %v872, %v904
    %v937 = vadd.f32 %v873, %v905
    %v938 = vadd.f32 %v874, %v906
    %v939 = vadd.f32 %v875, %v907
    %v940 = vadd.f32 %v876, %v908
    %v941 = vadd.f32 %v877, %v909
    %v942 = vadd.f32 %v878, %v910
    %v943 = vadd.f32 %v879, %v911
    %v944 = vadd.f32 %v880, %v912
    %v945 = vadd.f32 %v881, %v913
    %v946 = vadd.f32 %v882, %v914
    %v947 = vadd.f32 %v883, %v915
    %v948 = vadd.f32 %v884, %v916
    %v949 = vadd.f32 %v885, %v917
    %v950 = vadd.f32 %v886, %v918
    %v951 = vadd.f32 %v887, %v919
    %v952 = vadd.f32 %v888, %v920
    %v953 = vadd.f32 %v889, %v921
    %v954 = vadd.f32 %v890, %v922
    %v955 = vadd.f32 %v891, %v923
    %v956 = vadd.f32 %v924, 1.0
    %v957 = vadd.f32 %v925, 1.0
    %v958 = vadd.f32 %v926, 1.0
    %v959 = vadd.f32 %v927, 1.0
    %v960 = vadd.f32 %v928, 1.0
    %v961 = vadd.f32 %v929, 1.0
    %v962 = vadd.f32 %v930, 1.0
    %v963 = vadd.f32 %v931, 1.0
    %v964 = vadd.f32 %v932, 1.0
    %v965 = vadd.f32 %v933, 1.0
    %v966 = vadd.f32 %v934, 1.0
    %v967 = vadd.f32 %v935, 1.0
    %v968 = vadd.f32 %v936, 1.0
    %v969 = vadd.f32 %v937, 1.0
    %v970 = vadd.f32 %v938, 1.0
    %v971 = vadd.f32 %v939, 1.0
    %v972 = vadd.f32 %v940, 1.0
    %v973 = vadd.f32 %v941, 1.0
    %v974 = vadd.f32 %v942, 1.0
    %v975 = vadd.f32 %v943, 1.0
    %v976 = vadd.f32 %v944, 1.0
    %v977 = vadd.f32 %v945, 1.0
    %v978 = vadd.f32 %v946, 1.0
    %v979 = vadd.f32 %v947, 1.0
    %v980 = vadd.f32 %v948, 1.0
    %v981 = vadd.f32 %v949, 1.0
    %v982 = vadd.f32 %v950, 1.0
    %v983 = vadd.f32 %v951, 1.0
    %v984 = vadd.f32 %v952, 1.0
    %v985 = vadd.f32 %v953, 1.0
    %v986 = vadd.f32 %v954, 1.0
    %v987 = vadd.f32 %v955, 1.0
    %v988 = vmul.f32 %v828, %v956
    %v989 = vmul.f32 %v829, %v957
    %v990 = vmul.f32 %v830, %v958
    %v991 = vmul.f32 %v831, %v959
    %v992 = vmul.f32 %v832, %v960
    %v993 = vmul.f32 %v833, %v961
    %v994 = vmul.f32 %v834, %v962
    %v995 = vmul.f32 %v835, %v963
    %v996 = vmul.f32 %v836, %v964
    %v997 = vmul.f32 %v837, %v965
    %v998 = vmul.f32 %v838, %v966
    %v999 = vmul.f32 %v839, %v967
    %v1000 = vmul.f32 %v840, %v968
    %v1001 = vmul.f32 %v841, %v969
    %v1002 = vmul.f32 %v842, %v970
    %v1003 = vmul.f32 %v843, %v971
    %v1004 = vmul.f32 %v844, %v972
    %v1005 = vmul.f32 %v845, %v973
    %v1006 = vmul.f32 %v846, %v974
    %v1007 = vmul.f32 %v847, %v975
    %v1008 = vmul.f32 %v848, %v976
    %v1009 = vmul.f32 %v849, %v977
    %v1010 = vmul.f32 %v850, %v978
    %v1011 = vmul.f32 %v851, %v979
    %v1012 = vmul.f32 %v852, %v980
    %v1013 = vmul.f32 %v853, %v981
    %v1014 = vmul.f32 %v854, %v982
    %v1015 = vmul.f32 %v855, %v983
    %v1016 = vmul.f32 %v856, %v984
    %v1017 = vmul.f32 %v857, %v985
    %v1018 = vmul.f32 %v858, %v986
    %v1019 = vmul.f32 %v859, %v987
    %1020 = vst [vmem:[#allocation2] sm:$0xff] %v988
    %1021 = vst [vmem:[#allocation2 + $0x8] sm:$0xff] %v989
    %1022 = vst [vmem:[#allocation2 + $0x10] sm:$0xff] %v990
    %1023 = vst [vmem:[#allocation2 + $0x18] sm:$0xff] %v991
    %1024 = vst [vmem:[#allocation2 + $0x20] sm:$0xff] %v992
    %1025 = vst [vmem:[#allocation2 + $0x28] sm:$0xff] %v993
    %1026 = vst [vmem:[#allocation2 + $0x30] sm:$0xff] %v994
    %1027 = vst [vmem:[#allocation2 + $0x38] sm:$0xff] %v995
    %1028 = vst [vmem:[#allocation2 + $0x40] sm:$0xff] %v996
    %1029 = vst [vmem:[#allocation2 + $0x48] sm:$0xff] %v997
    %1030 = vst [vmem:[#allocation2 + $0x50] sm:$0xff] %v998
    %1031 = vst [vmem:[#allocation2 + $0x58] sm:$0xff] %v999
    %1032 = vst [vmem:[#allocation2 + $0x60] sm:$0xff] %v1000
    %1033 = vst [vmem:[#allocation2 + $0x68] sm:$0xff] %v1001
    %1034 = vst [vmem:[#allocation2 + $0x70] sm:$0xff] %v1002
    %1035 = vst [vmem:[#allocation2 + $0x78] sm:$0xff] %v1003
    %1036 = vst [vmem:[#allocation2 + $0x80] sm:$0xff] %v1004
    %1037 = vst [vmem:[#allocation2 + $0x88] sm:$0xff] %v1005
    %1038 = vst [vmem:[#allocation2 + $0x90] sm:$0xff] %v1006
    %1039 = vst [vmem:[#allocation2 + $0x98] sm:$0xff] %v1007
    %1040 = vst [vmem:[#allocation2 + $0xa0] sm:$0xff] %v1008
    %1041 = vst [vmem:[#allocation2 + $0xa8] sm:$0xff] %v1009
    %1042 = vst [vmem:[#allocation2 + $0xb0] sm:$0xff] %v1010
    %1043 = vst [vmem:[#allocation2 + $0xb8] sm:$0xff] %v1011
    %1044 = vst [vmem:[#allocation2 + $0xc0] sm:$0xff] %v1012
    %1045 = vst [vmem:[#allocation2 + $0xc8] sm:$0xff] %v1013
    %1046 = vst [vmem:[#allocation2 + $0xd0] sm:$0xff] %v1014
    %1047 = vst [vmem:[#allocation2 + $0xd8] sm:$0xff] %v1015
    %1048 = vst [vmem:[#allocation2 + $0xe0] sm:$0xff] %v1016
    %1049 = vst [vmem:[#allocation2 + $0xe8] sm:$0xff] %v1017
    %1050 = vst [vmem:[#allocation2 + $0xf0] sm:$0xff] %v1018
    %1051 = vst [vmem:[#allocation2 + $0xf8] sm:$0xff] %v1019
    // Predicated region
    $region10: #{tpu_custom_call.1} parent=1 // pred_check
      _
    $region11: #{tpu_custom_call.1} parent=1 // pred_check_branch
      %1053 = sbr.rel (0) target = $region13
    $region12: #{tpu_custom_call.1} parent=1 // pred_region
      %1055 = vsyncadd [#allocation3], 0
      %s1056 = sshll.u32 [#allocation2], 4
      %s1057 = int_to_ptr.vmem [resolvable:$true] %s1056
      %s1058 = sshll.u32 %s2, 4
      %s1059 = int_to_ptr.hbm [resolvable:$true] %s1058
      %1064 = dma.vmem_to_hbm [thread:$0]  %s1057, 4096, %s1059, [#allocation3], 512, 512, 32
    $region13: #{tpu_custom_call.1} parent=1 // pred_fallthru
      _
    // Predicated region
    $region14: #{tpu_custom_call.1} parent=1 // pred_check
      _
    $region15: #{tpu_custom_call.1} parent=1 // pred_check_branch
      %1066 = sbr.rel (0) target = $region17
    $region16: #{tpu_custom_call.1} parent=1 // pred_region
      %1068 = dma.done [#allocation3], 4096
    $region17: #{tpu_custom_call.1} parent=1 // pred_fallthru
      _
    %1069 = vsyncpa [#allocation3], 1

</llo_original>
